<compile_context>
chip_gen: v7x
topology: tpu7x:2x2x1
jax: 0.10.0
libtpu: 0.0.40
codegen_flags: <defaults>
</compile_context>

<pallas_src>
import functools

import jax
import jax.numpy as jnp
from jax.experimental import pallas as pl
from jax.experimental.pallas import tpu as pltpu


def _round_up(a, b):
    return (a + b - 1) // b * b


def _composite_loss_kernel(x_ref, g_hp_ref, g_sys_ref, g_dia_ref, g_csys_ref, g_cdia_ref,
                           out_ref, *, n_valid, block_n, tiles_per_core):
    """One (5, block_n) prediction tile + five (1, block_n) target tiles -> per-head sums.

    x_ref   : (5, block_n) VMEM predictions (row 0 = hypertension logit, rows 1..4 = BP)
    g_*_ref : (1, block_n) VMEM targets
    out_ref : (8, 128)     VMEM per-core partial sums; [k, 0] = sum for head k (k < 5)
    """
    c = pl.program_id(0)          # core slice ("parallel")
    i = pl.program_id(1)          # tile within this core's slice (reduction, "arbitrary")

    @pl.when(i == 0)
    def _init():
        out_ref[...] = jnp.zeros_like(out_ref)

    logical_tile = c * tiles_per_core + i
    start = logical_tile * block_n            # element offset of this logical tile

    x = x_ref[...].astype(jnp.float32)        # (5, block_n)
    g_hp = g_hp_ref[...].astype(jnp.float32)  # (1, block_n)
    g_sys = g_sys_ref[...].astype(jnp.float32)
    g_dia = g_dia_ref[...].astype(jnp.float32)
    g_csys = g_csys_ref[...].astype(jnp.float32)
    g_cdia = g_cdia_ref[...].astype(jnp.float32)

    def accumulate(valid):
        # Classification head: BCE(sigmoid(x), y) in stable logits form:
        #   max(x, 0) - x*y + log(1 + exp(-|x|))
        x0 = x[0:1, :]
        bce = jnp.maximum(x0, 0.0) - x0 * g_hp + jnp.log(1.0 + jnp.exp(-jnp.abs(x0)))
        if valid is not None:
            bce = jnp.where(valid, bce, 0.0)
        head_sums = [jnp.sum(bce, axis=-1, keepdims=True)]               # (1, 1)

        # Regression heads: squared error.
        for k, g in ((1, g_sys), (2, g_dia), (3, g_csys), (4, g_cdia)):
            d = x[k:k + 1, :] - g
            if valid is not None:
                d = jnp.where(valid, d, 0.0)
            head_sums.append(jnp.sum(d * d, axis=-1, keepdims=True))     # (1, 1)

        # Fuse the 5 scalars into one (5, 1) partial -> a single accumulator RMW per tile.
        row = jax.lax.broadcasted_iota(jnp.int32, (5, 1), 0)
        partial = jnp.zeros((5, 1), jnp.float32)
        for k, s in enumerate(head_sums):
            partial = partial + jnp.where(row == k, s, 0.0)
        out_ref[0:5, 0:1] += partial

    # Only the last logical tile (and fully out-of-range duplicates from the per-core tile
    # split) can contain invalid lanes; interior tiles skip the iota/compare/select mask.
    is_interior = start + block_n <= n_valid

    @pl.when(is_interior)
    def _interior():
        accumulate(None)

    @pl.when(jnp.logical_not(is_interior))
    def _edge():
        col = jax.lax.broadcasted_iota(jnp.int32, (1, block_n), 1) + start
        accumulate(col < n_valid)


def composite_loss(outputs, gt_hp_bool, gt_bp_sys, gt_bp_dia, gt_clin_bp_sys, gt_clin_bp_dia,
                   weight_classification=1.0, weight_regression=1.0,
                   block_n=65536, num_core_slices=2):
    """Pallas equivalent of CompositeLoss.forward. Returns a 6-tuple of scalars."""
    outputs = jnp.asarray(outputs, jnp.float32)
    n = outputs.shape[0]

    # TODO(synk): push this transpose upstream (producer should emit (5, N) directly).
    x_t = outputs.T                                                     # (5, N)

    targets = [jnp.asarray(t, jnp.float32).reshape(1, n)                # metadata-only
               for t in (gt_hp_bool, gt_bp_sys, gt_bp_dia, gt_clin_bp_sys, gt_clin_bp_dia)]

    # Lane-tile size: multiple of 128, capped by the (rounded-up) batch.
    tn = min(int(block_n), _round_up(n, 128))
    tn = max(128, _round_up(tn, 128))
    total_tiles = pl.cdiv(n, tn)
    tiles_per_core = pl.cdiv(total_tiles, num_core_slices)
    last_block = total_tiles - 1

    # Clamp logical tile -> valid block index; clamped duplicates (past the end) are fully
    # masked inside the kernel because their lane offsets are >= n.
    def block_map(c, i):
        return (0, jnp.minimum(c * tiles_per_core + i, last_block))

    # 6 inputs x 2 pipeline buffers x 8 sublanes (VMEM pads (1,tn)/(5,tn) to 8) x 4 bytes.
    vmem_limit = 2 * 6 * 8 * tn * 4 + (2 << 20)

    partials = pl.pallas_call(
        functools.partial(_composite_loss_kernel, n_valid=n, block_n=tn,
                          tiles_per_core=tiles_per_core),
        out_shape=jax.ShapeDtypeStruct((num_core_slices * 8, 128), jnp.float32),
        grid_spec=pltpu.PrefetchScalarGridSpec(
            num_scalar_prefetch=0,
            grid=(num_core_slices, tiles_per_core),
            in_specs=[pl.BlockSpec((5, tn), block_map)]
                    + [pl.BlockSpec((1, tn), block_map)] * 5,
            out_specs=pl.BlockSpec((8, 128), lambda c, i: (c, 0)),
        ),
        compiler_params=pltpu.CompilerParams(
            dimension_semantics=("parallel", "arbitrary"),
            vmem_limit_bytes=int(vmem_limit),
        ),
    )(x_t, *targets)

    # Combine the per-core partial sums; normalization and loss weights live in plain JAX
    # so changing the weights does not recompile the kernel.
    sums = jnp.sum(partials.reshape(num_core_slices, 8, 128)[:, :5, 0], axis=0)   # (5,)
    means = sums / jnp.float32(n)
    bce_loss = means[0]
    mse_sys, mse_dia, mse_csys, mse_cdia = means[1], means[2], means[3], means[4]
    total = (weight_classification * bce_loss
             + weight_regression * (mse_sys + mse_dia + mse_csys + mse_cdia))
    return (total, bce_loss, mse_sys, mse_dia, mse_csys, mse_cdia)


def _reference(outputs, gt_hp, gt_sys, gt_dia, gt_csys, gt_cdia, wc=1.0, wr=1.0):
    """Pure-JAX reference mirroring the PyTorch module (for sanity checking)."""
    p = jax.nn.sigmoid(outputs[:, 0])
    bce = jnp.mean(-(gt_hp * jnp.log(p) + (1.0 - gt_hp) * jnp.log(1.0 - p)))
    mse1 = jnp.mean((outputs[:, 1] - gt_sys) ** 2)
    mse2 = jnp.mean((outputs[:, 2] - gt_dia) ** 2)
    mse3 = jnp.mean((outputs[:, 3] - gt_csys) ** 2)
    mse4 = jnp.mean((outputs[:, 4] - gt_cdia) ** 2)
    total = wc * bce + wr * (mse1 + mse2 + mse3 + mse4)
    return (total, bce, mse1, mse2, mse3, mse4)


def _make_inputs(key, n):
    k0, k1, k2, k3, k4, k5 = jax.random.split(key, 6)
    outputs = jax.random.normal(k0, (n, 5), dtype=jnp.float32)
    gt_hp_bool = jax.random.bernoulli(k1, 0.5, (n,)).astype(jnp.float32)
    gt_bp_sys = jax.random.normal(k2, (n,), dtype=jnp.float32) * 0.5 + 1.2
    gt_bp_dia = jax.random.normal(k3, (n,), dtype=jnp.float32) * 0.5 + 0.8
    gt_clin_bp_sys = jax.random.normal(k4, (n,), dtype=jnp.float32) * 0.5 + 1.2
    gt_clin_bp_dia = jax.random.normal(k5, (n,), dtype=jnp.float32) * 0.5 + 0.8
    return outputs, gt_hp_bool, gt_bp_sys, gt_bp_dia, gt_clin_bp_sys, gt_clin_bp_dia


if __name__ == "__main__":
    key = jax.random.PRNGKey(0)
    key_a, key_b = jax.random.split(key, 2)

    # Small batch: single ragged tile (8 valid lanes of a 128-lane block), core 1 fully masked.
    args_a = _make_inputs(key_a, 8)
    result_a = composite_loss(*args_a, weight_classification=1.0, weight_regression=1.0)
    result_a = jax.block_until_ready(result_a)
    ref_a = _reference(*args_a)
    for got, want in zip(result_a, ref_a):
        assert jnp.allclose(got, want, rtol=1e-5, atol=1e-5), (got, want)

    # Multi-tile path: exercises the 2-core split, clamped duplicate tiles and the ragged tail.
    args_b = _make_inputs(key_b, 300)
    result_b = composite_loss(*args_b, weight_classification=1.0,
                              weight_regression=1.0, block_n=128)
    result_b = jax.block_until_ready(result_b)
    ref_b = _reference(*args_b)
    for got, want in zip(result_b, ref_b):
        assert jnp.allclose(got, want, rtol=1e-5, atol=1e-5), (got, want)

    print("KERNEL_OK")
</pallas_src>

<mosaic_0001>
module attributes {stable_mosaic.version = 11 : i64} {
  func.func @_composite_loss_kernel(%arg0: i32, %arg1: i32, %arg2: memref<5x128xf32, #tpu.memory_space<vmem>>, %arg3: memref<1x128xf32, #tpu.memory_space<vmem>>, %arg4: memref<1x128xf32, #tpu.memory_space<vmem>>, %arg5: memref<1x128xf32, #tpu.memory_space<vmem>>, %arg6: memref<1x128xf32, #tpu.memory_space<vmem>>, %arg7: memref<1x128xf32, #tpu.memory_space<vmem>>, %arg8: memref<8x128xf32, #tpu.memory_space<vmem>>) attributes {dimension_semantics = [#tpu.dimension_semantics<parallel>, #tpu.dimension_semantics<arbitrary>], iteration_bounds = array<i64: 2, 1>, scalar_prefetch = 0 : i64, scratch_operands = 0 : i64, tpu.core_type = #tpu.core_type<tc>, window_params = [{transform_indices = @transform_0, window_bounds = array<i64: 5, 128>}, {transform_indices = @transform_1, window_bounds = array<i64: 1, 128>}, {transform_indices = @transform_2, window_bounds = array<i64: 1, 128>}, {transform_indices = @transform_3, window_bounds = array<i64: 1, 128>}, {transform_indices = @transform_4, window_bounds = array<i64: 1, 128>}, {transform_indices = @transform_5, window_bounds = array<i64: 1, 128>}, {transform_indices = @transform_6, window_bounds = array<i64: 8, 128>}]} {
    %c0_i32 = arith.constant 0 : i32
    %0 = arith.cmpi eq, %arg1, %c0_i32 : i32
    %1 = arith.extui %0 : i1 to i32
    %c0_i32_0 = arith.constant 0 : i32
    %2 = arith.cmpi ne, %1, %c0_i32_0 : i32
    scf.if %2 {
      %cst = arith.constant 0.000000e+00 : f32
      %19 = vector.broadcast %cst : f32 to vector<8x128xf32>
      %c0_15 = arith.constant 0 : index
      %c0_16 = arith.constant 0 : index
      %20 = vector.load %arg8[%c0_15, %c0_16] : memref<8x128xf32, #tpu.memory_space<vmem>>, vector<8x128xf32>
      tpu.vector_store %arg8[%c0_15, %c0_16], %19 {strides = array<i32>} : memref<8x128xf32, #tpu.memory_space<vmem>>, vector<8x128xf32>,
    } else {
    }
    %c1_i32 = arith.constant 1 : i32
    %3 = arith.muli %arg0, %c1_i32 : i32
    %4 = arith.addi %3, %arg1 : i32
    %c128_i32 = arith.constant 128 : i32
    %5 = arith.muli %4, %c128_i32 : i32
    %c0 = arith.constant 0 : index
    %c0_1 = arith.constant 0 : index
    %6 = vector.load %arg2[%c0, %c0_1] : memref<5x128xf32, #tpu.memory_space<vmem>>, vector<5x128xf32>
    %c0_2 = arith.constant 0 : index
    %c0_3 = arith.constant 0 : index
    %7 = vector.load %arg3[%c0_2, %c0_3] : memref<1x128xf32, #tpu.memory_space<vmem>>, vector<1x128xf32>
    %c0_4 = arith.constant 0 : index
    %c0_5 = arith.constant 0 : index
    %8 = vector.load %arg4[%c0_4, %c0_5] : memref<1x128xf32, #tpu.memory_space<vmem>>, vector<1x128xf32>
    %c0_6 = arith.constant 0 : index
    %c0_7 = arith.constant 0 : index
    %9 = vector.load %arg5[%c0_6, %c0_7] : memref<1x128xf32, #tpu.memory_space<vmem>>, vector<1x128xf32>
    %c0_8 = arith.constant 0 : index
    %c0_9 = arith.constant 0 : index
    %10 = vector.load %arg6[%c0_8, %c0_9] : memref<1x128xf32, #tpu.memory_space<vmem>>, vector<1x128xf32>
    %c0_10 = arith.constant 0 : index
    %c0_11 = arith.constant 0 : index
    %11 = vector.load %arg7[%c0_10, %c0_11] : memref<1x128xf32, #tpu.memory_space<vmem>>, vector<1x128xf32>
    %c128_i32_12 = arith.constant 128 : i32
    %12 = arith.addi %5, %c128_i32_12 : i32
    %c8_i32 = arith.constant 8 : i32
    %13 = arith.cmpi sle, %12, %c8_i32 : i32
    %14 = arith.extui %13 : i1 to i32
    %c0_i32_13 = arith.constant 0 : i32
    %15 = arith.cmpi ne, %14, %c0_i32_13 : i32
    scf.if %15 {
      %19 = vector.extract_strided_slice %6 {offsets = [0, 0], sizes = [1, 128], strides = [1, 1]} : vector<5x128xf32> to vector<1x128xf32>
      %cst = arith.constant 0.000000e+00 : f32
      %20 = vector.broadcast %cst : f32 to vector<1x128xf32>
      %21 = arith.maximumf %19, %20 : vector<1x128xf32>
      %22 = arith.mulf %19, %7 : vector<1x128xf32>
      %23 = arith.subf %21, %22 : vector<1x128xf32>
      %24 = math.absf %19 : vector<1x128xf32>
      %cst_15 = arith.constant 0.000000e+00 : f32
      %25 = vector.broadcast %cst_15 : f32 to vector<1x128xf32>
      %26 = arith.subf %25, %24 : vector<1x128xf32>
      %27 = math.exp %26 : vector<1x128xf32>
      %cst_16 = arith.constant 1.000000e+00 : f32
      %28 = vector.broadcast %cst_16 : f32 to vector<1x128xf32>
      %29 = arith.addf %28, %27 : vector<1x128xf32>
      %30 = math.log %29 : vector<1x128xf32>
      %31 = arith.addf %23, %30 : vector<1x128xf32>
      %cst_17 = arith.constant dense<0.000000e+00> : vector<1xf32>
      %32 = vector.multi_reduction <add>, %31, %cst_17 [1] : vector<1x128xf32> to vector<1xf32>
      %33 = vector.shape_cast %32 : vector<1xf32> to vector<1x1xf32>
      %34 = vector.extract_strided_slice %6 {offsets = [1, 0], sizes = [1, 128], strides = [1, 1]} : vector<5x128xf32> to vector<1x128xf32>
      %35 = arith.subf %34, %8 : vector<1x128xf32>
      %36 = arith.mulf %35, %35 : vector<1x128xf32>
      %cst_18 = arith.constant dense<0.000000e+00> : vector<1xf32>
      %37 = vector.multi_reduction <add>, %36, %cst_18 [1] : vector<1x128xf32> to vector<1xf32>
      %38 = vector.shape_cast %37 : vector<1xf32> to vector<1x1xf32>
      %39 = vector.extract_strided_slice %6 {offsets = [2, 0], sizes = [1, 128], strides = [1, 1]} : vector<5x128xf32> to vector<1x128xf32>
      %40 = arith.subf %39, %9 : vector<1x128xf32>
      %41 = arith.mulf %40, %40 : vector<1x128xf32>
      %cst_19 = arith.constant dense<0.000000e+00> : vector<1xf32>
      %42 = vector.multi_reduction <add>, %41, %cst_19 [1] : vector<1x128xf32> to vector<1xf32>
      %43 = vector.shape_cast %42 : vector<1xf32> to vector<1x1xf32>
      %44 = vector.extract_strided_slice %6 {offsets = [3, 0], sizes = [1, 128], strides = [1, 1]} : vector<5x128xf32> to vector<1x128xf32>
      %45 = arith.subf %44, %10 : vector<1x128xf32>
      %46 = arith.mulf %45, %45 : vector<1x128xf32>
      %cst_20 = arith.constant dense<0.000000e+00> : vector<1xf32>
      %47 = vector.multi_reduction <add>, %46, %cst_20 [1] : vector<1x128xf32> to vector<1xf32>
      %48 = vector.shape_cast %47 : vector<1xf32> to vector<1x1xf32>
      %49 = vector.extract_strided_slice %6 {offsets = [4, 0], sizes = [1, 128], strides = [1, 1]} : vector<5x128xf32> to vector<1x128xf32>
      %50 = arith.subf %49, %11 : vector<1x128xf32>
      %51 = arith.mulf %50, %50 : vector<1x128xf32>
      %cst_21 = arith.constant dense<0.000000e+00> : vector<1xf32>
      %52 = vector.multi_reduction <add>, %51, %cst_21 [1] : vector<1x128xf32> to vector<1xf32>
      %53 = vector.shape_cast %52 : vector<1xf32> to vector<1x1xf32>
      %54 = tpu.iota {dimensions = array<i32: 0>} : vector<5x1xi32>
      %cst_22 = arith.constant 0.000000e+00 : f32
      %55 = vector.broadcast %cst_22 : f32 to vector<5x1xf32>
      %c0_i32_23 = arith.constant 0 : i32
      %56 = vector.broadcast %c0_i32_23 : i32 to vector<5x1xi32>
      %57 = arith.cmpi eq, %54, %56 : vector<5x1xi32>
      %cst_24 = arith.constant 0.000000e+00 : f32
      %58 = vector.shape_cast %33 : vector<1x1xf32> to vector<1x1xf32>
      %59 = vector.broadcast %58 : vector<1x1xf32> to vector<5x1xf32>
      %60 = vector.broadcast %cst_24 : f32 to vector<5x1xf32>
      %61 = arith.select %57, %59, %60 : vector<5x1xi1>, vector<5x1xf32>
      %62 = arith.addf %55, %61 : vector<5x1xf32>
      %c1_i32_25 = arith.constant 1 : i32
      %63 = vector.broadcast %c1_i32_25 : i32 to vector<5x1xi32>
      %64 = arith.cmpi eq, %54, %63 : vector<5x1xi32>
      %cst_26 = arith.constant 0.000000e+00 : f32
      %65 = vector.shape_cast %38 : vector<1x1xf32> to vector<1x1xf32>
      %66 = vector.broadcast %65 : vector<1x1xf32> to vector<5x1xf32>
      %67 = vector.broadcast %cst_26 : f32 to vector<5x1xf32>
      %68 = arith.select %64, %66, %67 : vector<5x1xi1>, vector<5x1xf32>
      %69 = arith.addf %62, %68 : vector<5x1xf32>
      %c2_i32 = arith.constant 2 : i32
      %70 = vector.broadcast %c2_i32 : i32 to vector<5x1xi32>
      %71 = arith.cmpi eq, %54, %70 : vector<5x1xi32>
      %cst_27 = arith.constant 0.000000e+00 : f32
      %72 = vector.shape_cast %43 : vector<1x1xf32> to vector<1x1xf32>
      %73 = vector.broadcast %72 : vector<1x1xf32> to vector<5x1xf32>
      %74 = vector.broadcast %cst_27 : f32 to vector<5x1xf32>
      %75 = arith.select %71, %73, %74 : vector<5x1xi1>, vector<5x1xf32>
      %76 = arith.addf %69, %75 : vector<5x1xf32>
      %c3_i32 = arith.constant 3 : i32
      %77 = vector.broadcast %c3_i32 : i32 to vector<5x1xi32>
      %78 = arith.cmpi eq, %54, %77 : vector<5x1xi32>
      %cst_28 = arith.constant 0.000000e+00 : f32
      %79 = vector.shape_cast %48 : vector<1x1xf32> to vector<1x1xf32>
      %80 = vector.broadcast %79 : vector<1x1xf32> to vector<5x1xf32>
      %81 = vector.broadcast %cst_28 : f32 to vector<5x1xf32>
      %82 = arith.select %78, %80, %81 : vector<5x1xi1>, vector<5x1xf32>
      %83 = arith.addf %76, %82 : vector<5x1xf32>
      %c4_i32 = arith.constant 4 : i32
      %84 = vector.broadcast %c4_i32 : i32 to vector<5x1xi32>
      %85 = arith.cmpi eq, %54, %84 : vector<5x1xi32>
      %cst_29 = arith.constant 0.000000e+00 : f32
      %86 = vector.shape_cast %53 : vector<1x1xf32> to vector<1x1xf32>
      %87 = vector.broadcast %86 : vector<1x1xf32> to vector<5x1xf32>
      %88 = vector.broadcast %cst_29 : f32 to vector<5x1xf32>
      %89 = arith.select %85, %87, %88 : vector<5x1xi1>, vector<5x1xf32>
      %90 = arith.addf %83, %89 : vector<5x1xf32>
      %c0_30 = arith.constant 0 : index
      %c0_31 = arith.constant 0 : index
      %91 = vector.load %arg8[%c0_30, %c0_31] : memref<8x128xf32, #tpu.memory_space<vmem>>, vector<5x1xf32>
      %92 = arith.addf %91, %90 : vector<5x1xf32>
      %c0_32 = arith.constant 0 : index
      %c0_33 = arith.constant 0 : index
      %93 = vector.load %arg8[%c0_32, %c0_33] : memref<8x128xf32, #tpu.memory_space<vmem>>, vector<5x1xf32>
      tpu.vector_store %arg8[%c0_32, %c0_33], %92 {strides = array<i32>} : memref<8x128xf32, #tpu.memory_space<vmem>>, vector<5x1xf32>,
    } else {
    }
    %true = arith.constant true
    %16 = arith.xori %13, %true : i1
    %17 = arith.extui %16 : i1 to i32
    %c0_i32_14 = arith.constant 0 : i32
    %18 = arith.cmpi ne, %17, %c0_i32_14 : i32
    scf.if %18 {
      %19 = tpu.iota {dimensions = array<i32: 1>} : vector<1x128xi32>
      %20 = vector.broadcast %5 : i32 to vector<1x128xi32>
      %21 = arith.addi %19, %20 : vector<1x128xi32>
      %c8_i32_15 = arith.constant 8 : i32
      %22 = vector.broadcast %c8_i32_15 : i32 to vector<1x128xi32>
      %23 = arith.cmpi slt, %21, %22 : vector<1x128xi32>
      %24 = vector.extract_strided_slice %6 {offsets = [0, 0], sizes = [1, 128], strides = [1, 1]} : vector<5x128xf32> to vector<1x128xf32>
      %cst = arith.constant 0.000000e+00 : f32
      %25 = vector.broadcast %cst : f32 to vector<1x128xf32>
      %26 = arith.maximumf %24, %25 : vector<1x128xf32>
      %27 = arith.mulf %24, %7 : vector<1x128xf32>
      %28 = arith.subf %26, %27 : vector<1x128xf32>
      %29 = math.absf %24 : vector<1x128xf32>
      %cst_16 = arith.constant 0.000000e+00 : f32
      %30 = vector.broadcast %cst_16 : f32 to vector<1x128xf32>
      %31 = arith.subf %30, %29 : vector<1x128xf32>
      %32 = math.exp %31 : vector<1x128xf32>
      %cst_17 = arith.constant 1.000000e+00 : f32
      %33 = vector.broadcast %cst_17 : f32 to vector<1x128xf32>
      %34 = arith.addf %33, %32 : vector<1x128xf32>
      %35 = math.log %34 : vector<1x128xf32>
      %36 = arith.addf %28, %35 : vector<1x128xf32>
      %cst_18 = arith.constant 0.000000e+00 : f32
      %37 = vector.broadcast %cst_18 : f32 to vector<1x128xf32>
      %38 = arith.select %23, %36, %37 : vector<1x128xi1>, vector<1x128xf32>
      %cst_19 = arith.constant dense<0.000000e+00> : vector<1xf32>
      %39 = vector.multi_reduction <add>, %38, %cst_19 [1] : vector<1x128xf32> to vector<1xf32>
      %40 = vector.shape_cast %39 : vector<1xf32> to vector<1x1xf32>
      %41 = vector.extract_strided_slice %6 {offsets = [1, 0], sizes = [1, 128], strides = [1, 1]} : vector<5x128xf32> to vector<1x128xf32>
      %42 = arith.subf %41, %8 : vector<1x128xf32>
      %cst_20 = arith.constant 0.000000e+00 : f32
      %43 = vector.broadcast %cst_20 : f32 to vector<1x128xf32>
      %44 = arith.select %23, %42, %43 : vector<1x128xi1>, vector<1x128xf32>
      %45 = arith.mulf %44, %44 : vector<1x128xf32>
      %cst_21 = arith.constant dense<0.000000e+00> : vector<1xf32>
      %46 = vector.multi_reduction <add>, %45, %cst_21 [1] : vector<1x128xf32> to vector<1xf32>
      %47 = vector.shape_cast %46 : vector<1xf32> to vector<1x1xf32>
      %48 = vector.extract_strided_slice %6 {offsets = [2, 0], sizes = [1, 128], strides = [1, 1]} : vector<5x128xf32> to vector<1x128xf32>
      %49 = arith.subf %48, %9 : vector<1x128xf32>
      %cst_22 = arith.constant 0.000000e+00 : f32
      %50 = vector.broadcast %cst_22 : f32 to vector<1x128xf32>
      %51 = arith.select %23, %49, %50 : vector<1x128xi1>, vector<1x128xf32>
      %52 = arith.mulf %51, %51 : vector<1x128xf32>
      %cst_23 = arith.constant dense<0.000000e+00> : vector<1xf32>
      %53 = vector.multi_reduction <add>, %52, %cst_23 [1] : vector<1x128xf32> to vector<1xf32>
      %54 = vector.shape_cast %53 : vector<1xf32> to vector<1x1xf32>
      %55 = vector.extract_strided_slice %6 {offsets = [3, 0], sizes = [1, 128], strides = [1, 1]} : vector<5x128xf32> to vector<1x128xf32>
      %56 = arith.subf %55, %10 : vector<1x128xf32>
      %cst_24 = arith.constant 0.000000e+00 : f32
      %57 = vector.broadcast %cst_24 : f32 to vector<1x128xf32>
      %58 = arith.select %23, %56, %57 : vector<1x128xi1>, vector<1x128xf32>
      %59 = arith.mulf %58, %58 : vector<1x128xf32>
      %cst_25 = arith.constant dense<0.000000e+00> : vector<1xf32>
      %60 = vector.multi_reduction <add>, %59, %cst_25 [1] : vector<1x128xf32> to vector<1xf32>
      %61 = vector.shape_cast %60 : vector<1xf32> to vector<1x1xf32>
      %62 = vector.extract_strided_slice %6 {offsets = [4, 0], sizes = [1, 128], strides = [1, 1]} : vector<5x128xf32> to vector<1x128xf32>
      %63 = arith.subf %62, %11 : vector<1x128xf32>
      %cst_26 = arith.constant 0.000000e+00 : f32
      %64 = vector.broadcast %cst_26 : f32 to vector<1x128xf32>
      %65 = arith.select %23, %63, %64 : vector<1x128xi1>, vector<1x128xf32>
      %66 = arith.mulf %65, %65 : vector<1x128xf32>
      %cst_27 = arith.constant dense<0.000000e+00> : vector<1xf32>
      %67 = vector.multi_reduction <add>, %66, %cst_27 [1] : vector<1x128xf32> to vector<1xf32>
      %68 = vector.shape_cast %67 : vector<1xf32> to vector<1x1xf32>
      %69 = tpu.iota {dimensions = array<i32: 0>} : vector<5x1xi32>
      %cst_28 = arith.constant 0.000000e+00 : f32
      %70 = vector.broadcast %cst_28 : f32 to vector<5x1xf32>
      %c0_i32_29 = arith.constant 0 : i32
      %71 = vector.broadcast %c0_i32_29 : i32 to vector<5x1xi32>
      %72 = arith.cmpi eq, %69, %71 : vector<5x1xi32>
      %cst_30 = arith.constant 0.000000e+00 : f32
      %73 = vector.shape_cast %40 : vector<1x1xf32> to vector<1x1xf32>
      %74 = vector.broadcast %73 : vector<1x1xf32> to vector<5x1xf32>
      %75 = vector.broadcast %cst_30 : f32 to vector<5x1xf32>
      %76 = arith.select %72, %74, %75 : vector<5x1xi1>, vector<5x1xf32>
      %77 = arith.addf %70, %76 : vector<5x1xf32>
      %c1_i32_31 = arith.constant 1 : i32
      %78 = vector.broadcast %c1_i32_31 : i32 to vector<5x1xi32>
      %79 = arith.cmpi eq, %69, %78 : vector<5x1xi32>
      %cst_32 = arith.constant 0.000000e+00 : f32
      %80 = vector.shape_cast %47 : vector<1x1xf32> to vector<1x1xf32>
      %81 = vector.broadcast %80 : vector<1x1xf32> to vector<5x1xf32>
      %82 = vector.broadcast %cst_32 : f32 to vector<5x1xf32>
      %83 = arith.select %79, %81, %82 : vector<5x1xi1>, vector<5x1xf32>
      %84 = arith.addf %77, %83 : vector<5x1xf32>
      %c2_i32 = arith.constant 2 : i32
      %85 = vector.broadcast %c2_i32 : i32 to vector<5x1xi32>
      %86 = arith.cmpi eq, %69, %85 : vector<5x1xi32>
      %cst_33 = arith.constant 0.000000e+00 : f32
      %87 = vector.shape_cast %54 : vector<1x1xf32> to vector<1x1xf32>
      %88 = vector.broadcast %87 : vector<1x1xf32> to vector<5x1xf32>
      %89 = vector.broadcast %cst_33 : f32 to vector<5x1xf32>
      %90 = arith.select %86, %88, %89 : vector<5x1xi1>, vector<5x1xf32>
      %91 = arith.addf %84, %90 : vector<5x1xf32>
      %c3_i32 = arith.constant 3 : i32
      %92 = vector.broadcast %c3_i32 : i32 to vector<5x1xi32>
      %93 = arith.cmpi eq, %69, %92 : vector<5x1xi32>
      %cst_34 = arith.constant 0.000000e+00 : f32
      %94 = vector.shape_cast %61 : vector<1x1xf32> to vector<1x1xf32>
      %95 = vector.broadcast %94 : vector<1x1xf32> to vector<5x1xf32>
      %96 = vector.broadcast %cst_34 : f32 to vector<5x1xf32>
      %97 = arith.select %93, %95, %96 : vector<5x1xi1>, vector<5x1xf32>
      %98 = arith.addf %91, %97 : vector<5x1xf32>
      %c4_i32 = arith.constant 4 : i32
      %99 = vector.broadcast %c4_i32 : i32 to vector<5x1xi32>
      %100 = arith.cmpi eq, %69, %99 : vector<5x1xi32>
      %cst_35 = arith.constant 0.000000e+00 : f32
      %101 = vector.shape_cast %68 : vector<1x1xf32> to vector<1x1xf32>
      %102 = vector.broadcast %101 : vector<1x1xf32> to vector<5x1xf32>
      %103 = vector.broadcast %cst_35 : f32 to vector<5x1xf32>
      %104 = arith.select %100, %102, %103 : vector<5x1xi1>, vector<5x1xf32>
      %105 = arith.addf %98, %104 : vector<5x1xf32>
      %c0_36 = arith.constant 0 : index
      %c0_37 = arith.constant 0 : index
      %106 = vector.load %arg8[%c0_36, %c0_37] : memref<8x128xf32, #tpu.memory_space<vmem>>, vector<5x1xf32>
      %107 = arith.addf %106, %105 : vector<5x1xf32>
      %c0_38 = arith.constant 0 : index
      %c0_39 = arith.constant 0 : index
      %108 = vector.load %arg8[%c0_38, %c0_39] : memref<8x128xf32, #tpu.memory_space<vmem>>, vector<5x1xf32>
      tpu.vector_store %arg8[%c0_38, %c0_39], %107 {strides = array<i32>} : memref<8x128xf32, #tpu.memory_space<vmem>>, vector<5x1xf32>,
    } else {
    }
    return
  }
  func.func @transform_0(%arg0: i32, %arg1: i32) -> (i32, i32) {
    %c1_i32 = arith.constant 1 : i32
    %0 = arith.muli %arg0, %c1_i32 : i32
    %1 = arith.addi %0, %arg1 : i32
    %c0_i32 = arith.constant 0 : i32
    %2 = arith.minsi %1, %c0_i32 : i32
    %c0_i32_0 = arith.constant 0 : i32
    %c0_i32_1 = arith.constant 0 : i32
    return %c0_i32_0, %2 : i32, i32
  }
  func.func @transform_1(%arg0: i32, %arg1: i32) -> (i32, i32) {
    %c1_i32 = arith.constant 1 : i32
    %0 = arith.muli %arg0, %c1_i32 : i32
    %1 = arith.addi %0, %arg1 : i32
    %c0_i32 = arith.constant 0 : i32
    %2 = arith.minsi %1, %c0_i32 : i32
    %c0_i32_0 = arith.constant 0 : i32
    %c0_i32_1 = arith.constant 0 : i32
    return %c0_i32_0, %2 : i32, i32
  }
  func.func @transform_2(%arg0: i32, %arg1: i32) -> (i32, i32) {
    %c1_i32 = arith.constant 1 : i32
    %0 = arith.muli %arg0, %c1_i32 : i32
    %1 = arith.addi %0, %arg1 : i32
    %c0_i32 = arith.constant 0 : i32
    %2 = arith.minsi %1, %c0_i32 : i32
    %c0_i32_0 = arith.constant 0 : i32
    %c0_i32_1 = arith.constant 0 : i32
    return %c0_i32_0, %2 : i32, i32
  }
  func.func @transform_3(%arg0: i32, %arg1: i32) -> (i32, i32) {
    %c1_i32 = arith.constant 1 : i32
    %0 = arith.muli %arg0, %c1_i32 : i32
    %1 = arith.addi %0, %arg1 : i32
    %c0_i32 = arith.constant 0 : i32
    %2 = arith.minsi %1, %c0_i32 : i32
    %c0_i32_0 = arith.constant 0 : i32
    %c0_i32_1 = arith.constant 0 : i32
    return %c0_i32_0, %2 : i32, i32
  }
  func.func @transform_4(%arg0: i32, %arg1: i32) -> (i32, i32) {
    %c1_i32 = arith.constant 1 : i32
    %0 = arith.muli %arg0, %c1_i32 : i32
    %1 = arith.addi %0, %arg1 : i32
    %c0_i32 = arith.constant 0 : i32
    %2 = arith.minsi %1, %c0_i32 : i32
    %c0_i32_0 = arith.constant 0 : i32
    %c0_i32_1 = arith.constant 0 : i32
    return %c0_i32_0, %2 : i32, i32
  }
  func.func @transform_5(%arg0: i32, %arg1: i32) -> (i32, i32) {
    %c1_i32 = arith.constant 1 : i32
    %0 = arith.muli %arg0, %c1_i32 : i32
    %1 = arith.addi %0, %arg1 : i32
    %c0_i32 = arith.constant 0 : i32
    %2 = arith.minsi %1, %c0_i32 : i32
    %c0_i32_0 = arith.constant 0 : i32
    %c0_i32_1 = arith.constant 0 : i32
    return %c0_i32_0, %2 : i32, i32
  }
  func.func @transform_6(%arg0: i32, %arg1: i32) -> (i32, i32) {
    %c0_i32 = arith.constant 0 : i32
    %c0_i32_0 = arith.constant 0 : i32
    return %arg0, %c0_i32 : i32, i32
  }
}

</mosaic_0001>

<llo_original>
// kernel: tpu_custom_call.1
$region0: #{tpu_custom_call.1}
  #allocation0 [shape = 'u32[]', space=smem, size = 0x4, offset = 0x4, fixed_abs, tag = 'smem constant byte address 0x4 - core index']
  #allocation1 [shape = 'u32[144,128]{1,0:T(1,128)}', space=vmem, size = 0x12000, scoped, tag = 'internal scratch']
  %s0 = inlined_call_operand.hbm [shape: f32[5,8], index: 0, kind: input, shape index: {}]
  %s1 = inlined_call_operand.vmem [shape: f32[1,8], index: 1, kind: input, shape index: {}]
  %s2 = inlined_call_operand.vmem [shape: f32[1,8], index: 2, kind: input, shape index: {}]
  %s3 = inlined_call_operand.vmem [shape: f32[1,8], index: 3, kind: input, shape index: {}]
  %s4 = inlined_call_operand.vmem [shape: f32[1,8], index: 4, kind: input, shape index: {}]
  %s5 = inlined_call_operand.vmem [shape: f32[1,8], index: 5, kind: input, shape index: {}]
  %s6 = inlined_call_operand.hbm [shape: f32[16,128], index: 6, kind: output, shape index: {}]
  %s7 = sld [smem:[#allocation0]]
  $region73: #{tpu_custom_call.1} parent=0
    _
  %s9 = ssub.s32 1, %s7
  %s10 = scalar_select 0, %s9, %s7
  $region1: #{tpu_custom_call.1} parent=0
    #allocation2 [shape = 'u8[8192]{0}', space=vmem, size = 0x2000, scoped, tag = 'input window, operand 0']
    #allocation3 [shape = 's32[2]{0}', space=sflag, size = 0x8, scoped, tag = 'scoped memory for tpu_custom_call.1']
    #allocation4 [shape = 's32[2]{0}', space=sflag, size = 0x8, scoped, tag = 'scoped memory for tpu_custom_call.1']
    #allocation5 [shape = 'u8[8192]{0}', space=vmem, size = 0x2000, scoped, tag = 'output window, operand 0']
    %11 = vsyncpa [#allocation3], 0
    %s12 = scalar_lea.sflag [#allocation3], 1
    %13 = vsyncpa %s12, 0
    %14 = vsyncpa [#allocation4], 0
    %s15 = scalar_lea.sflag [#allocation4], 1
    %16 = vsyncpa %s15, 0
    loop: start=0, step=1, limit=4
    $region2: #{tpu_custom_call.1} parent=1 // loop_pre_header
      _
    $region3: #{tpu_custom_call.1} parent=1 // loop_header
      %s18 = sphi 0, %s22
      %p19 = scmp.ge.s32.totalorder %s18, 4
      %s25 = sphi 0, %s37
      %s26 = sphi 0, %s33
      %s27 = sphi 0, %s25
      %s28 = sphi 0, %s26
      %s29 = sphi 0, %s27
      %s30 = sphi 0, %s28
      %s46 = sphi 0, %s48
      %s49 = sphi 0, %s46
      %s50 = sphi 0, %s49
      %s66 = sphi 0, %s50
      %s78 = sphi 0, %s80
      %s81 = sphi 0, %s78
      %s82 = sphi 0, %s81
      %s98 = sphi 0, %s82
      %s110 = sphi 0, %s112
      %s113 = sphi 0, %s110
      %s114 = sphi 0, %s113
      %s130 = sphi 0, %s114
      %s142 = sphi 0, %s144
      %s145 = sphi 0, %s142
      %s146 = sphi 0, %s145
      %s162 = sphi 0, %s146
      %s174 = sphi 0, %s176
      %s177 = sphi 0, %s174
      %s178 = sphi 0, %s177
      %s194 = sphi 0, %s178
      %s206 = sphi 0, %s208
      %s209 = sphi 0, %s206
      %s210 = sphi 0, %s209
      %s226 = sphi 0, %s210
      %s232 = sphi 0, %s234
      %s235 = sphi 0, %s232
      %s236 = sphi 0, %s235
      %s252 = sphi 0, %s236
    $region4: #{tpu_custom_call.1} parent=1 // loop_header_branch
      %21 = sbr.rel (%p19) target = $region8
    $region5: #{tpu_custom_call.1} parent=1 // loop_body
      %s23 = ssub.s32 %s18, 1
      %s24 = ssub.s32 %s18, 2
      %s31 = sadd.s32 1, %s26
      %p32 = scmp.ge.s32.totalorder %s31, 1
      %s33 = scalar_select %p32, 0, %s31
      %s34 = sadd.s32 1, %s25
      %s35 = scalar_select %p32, %s34, %s25
      %p36 = scmp.ge.s32.totalorder %s35, 2
      %s37 = scalar_select %p36, 0, %s35
      %s38 = sadd.s32 %s25, %s26
      %p39 = scmp.lt.s32.totalorder %s38, 0
      %s40 = scalar_select %p39, %s38, 0
      %s41 = sadd.s32 %s37, %s33
      %p42 = scmp.lt.s32.totalorder %s41, 0
      %s43 = scalar_select %p42, %s41, 0
      %s44 = ssub.s32 %s40, %s43
      %p45 = scmp.eq.s32.totalorder %s44, 0
      %s47 = sadd.s32 %s46, 1
      %s48 = scalar_select %p45, %s46, %s47
      %p51 = pneg %p45
      %p52 = scmp.eq.s32.totalorder %s18, 1
      %p53 = por %p51, %p52
      %p54 = scmp.ne.s32.totalorder %s46, %s49
      %p55 = scmp.eq.s32.totalorder %s18, 0
      %p56 = por %p54, %p55
      %p57 = scmp.ne.s32.totalorder %s46, %s49
      %p58 = scmp.eq.s32.totalorder %s23, 1
      %p59 = por %p57, %p58
      %p60 = scmp.ne.s32.totalorder %s49, %s50
      %p61 = scmp.eq.s32.totalorder %s23, 0
      %p62 = por %p60, %p61
      %p63 = scmp.ne.s32.totalorder %s49, %s50
      %p64 = scmp.eq.s32.totalorder %s24, 1
      %p65 = por %p63, %p64
      %p67 = scmp.ne.s32.totalorder %s50, %s66
      %p68 = scmp.eq.s32.totalorder %s24, 0
      %p69 = por %p67, %p68
      %s70 = sadd.s32 %s25, %s26
      %p71 = scmp.lt.s32.totalorder %s70, 0
      %s72 = scalar_select %p71, %s70, 0
      %s73 = sadd.s32 %s37, %s33
      %p74 = scmp.lt.s32.totalorder %s73, 0
      %s75 = scalar_select %p74, %s73, 0
      %s76 = ssub.s32 %s72, %s75
      %p77 = scmp.eq.s32.totalorder %s76, 0
      %s79 = sadd.s32 %s78, 1
      %s80 = scalar_select %p77, %s78, %s79
      %p83 = pneg %p77
      %p84 = scmp.eq.s32.totalorder %s18, 1
      %p85 = por %p83, %p84
      %p86 = scmp.ne.s32.totalorder %s78, %s81
      %p87 = scmp.eq.s32.totalorder %s18, 0
      %p88 = por %p86, %p87
      %p89 = scmp.ne.s32.totalorder %s78, %s81
      %p90 = scmp.eq.s32.totalorder %s23, 1
      %p91 = por %p89, %p90
      %p92 = scmp.ne.s32.totalorder %s81, %s82
      %p93 = scmp.eq.s32.totalorder %s23, 0
      %p94 = por %p92, %p93
      %p95 = scmp.ne.s32.totalorder %s81, %s82
      %p96 = scmp.eq.s32.totalorder %s24, 1
      %p97 = por %p95, %p96
      %p99 = scmp.ne.s32.totalorder %s82, %s98
      %p100 = scmp.eq.s32.totalorder %s24, 0
      %p101 = por %p99, %p100
      %s102 = sadd.s32 %s25, %s26
      %p103 = scmp.lt.s32.totalorder %s102, 0
      %s104 = scalar_select %p103, %s102, 0
      %s105 = sadd.s32 %s37, %s33
      %p106 = scmp.lt.s32.totalorder %s105, 0
      %s107 = scalar_select %p106, %s105, 0
      %s108 = ssub.s32 %s104, %s107
      %p109 = scmp.eq.s32.totalorder %s108, 0
      %s111 = sadd.s32 %s110, 1
      %s112 = scalar_select %p109, %s110, %s111
      %p115 = pneg %p109
      %p116 = scmp.eq.s32.totalorder %s18, 1
      %p117 = por %p115, %p116
      %p118 = scmp.ne.s32.totalorder %s110, %s113
      %p119 = scmp.eq.s32.totalorder %s18, 0
      %p120 = por %p118, %p119
      %p121 = scmp.ne.s32.totalorder %s110, %s113
      %p122 = scmp.eq.s32.totalorder %s23, 1
      %p123 = por %p121, %p122
      %p124 = scmp.ne.s32.totalorder %s113, %s114
      %p125 = scmp.eq.s32.totalorder %s23, 0
      %p126 = por %p124, %p125
      %p127 = scmp.ne.s32.totalorder %s113, %s114
      %p128 = scmp.eq.s32.totalorder %s24, 1
      %p129 = por %p127, %p128
      %p131 = scmp.ne.s32.totalorder %s114, %s130
      %p132 = scmp.eq.s32.totalorder %s24, 0
      %p133 = por %p131, %p132
      %s134 = sadd.s32 %s25, %s26
      %p135 = scmp.lt.s32.totalorder %s134, 0
      %s136 = scalar_select %p135, %s134, 0
      %s137 = sadd.s32 %s37, %s33
      %p138 = scmp.lt.s32.totalorder %s137, 0
      %s139 = scalar_select %p138, %s137, 0
      %s140 = ssub.s32 %s136, %s139
      %p141 = scmp.eq.s32.totalorder %s140, 0
      %s143 = sadd.s32 %s142, 1
      %s144 = scalar_select %p141, %s142, %s143
      %p147 = pneg %p141
      %p148 = scmp.eq.s32.totalorder %s18, 1
      %p149 = por %p147, %p148
      %p150 = scmp.ne.s32.totalorder %s142, %s145
      %p151 = scmp.eq.s32.totalorder %s18, 0
      %p152 = por %p150, %p151
      %p153 = scmp.ne.s32.totalorder %s142, %s145
      %p154 = scmp.eq.s32.totalorder %s23, 1
      %p155 = por %p153, %p154
      %p156 = scmp.ne.s32.totalorder %s145, %s146
      %p157 = scmp.eq.s32.totalorder %s23, 0
      %p158 = por %p156, %p157
      %p159 = scmp.ne.s32.totalorder %s145, %s146
      %p160 = scmp.eq.s32.totalorder %s24, 1
      %p161 = por %p159, %p160
      %p163 = scmp.ne.s32.totalorder %s146, %s162
      %p164 = scmp.eq.s32.totalorder %s24, 0
      %p165 = por %p163, %p164
      %s166 = sadd.s32 %s25, %s26
      %p167 = scmp.lt.s32.totalorder %s166, 0
      %s168 = scalar_select %p167, %s166, 0
      %s169 = sadd.s32 %s37, %s33
      %p170 = scmp.lt.s32.totalorder %s169, 0
      %s171 = scalar_select %p170, %s169, 0
      %s172 = ssub.s32 %s168, %s171
      %p173 = scmp.eq.s32.totalorder %s172, 0
      %s175 = sadd.s32 %s174, 1
      %s176 = scalar_select %p173, %s174, %s175
      %p179 = pneg %p173
      %p180 = scmp.eq.s32.totalorder %s18, 1
      %p181 = por %p179, %p180
      %p182 = scmp.ne.s32.totalorder %s174, %s177
      %p183 = scmp.eq.s32.totalorder %s18, 0
      %p184 = por %p182, %p183
      %p185 = scmp.ne.s32.totalorder %s174, %s177
      %p186 = scmp.eq.s32.totalorder %s23, 1
      %p187 = por %p185, %p186
      %p188 = scmp.ne.s32.totalorder %s177, %s178
      %p189 = scmp.eq.s32.totalorder %s23, 0
      %p190 = por %p188, %p189
      %p191 = scmp.ne.s32.totalorder %s177, %s178
      %p192 = scmp.eq.s32.totalorder %s24, 1
      %p193 = por %p191, %p192
      %p195 = scmp.ne.s32.totalorder %s178, %s194
      %p196 = scmp.eq.s32.totalorder %s24, 0
      %p197 = por %p195, %p196
      %s198 = sadd.s32 %s25, %s26
      %p199 = scmp.lt.s32.totalorder %s198, 0
      %s200 = scalar_select %p199, %s198, 0
      %s201 = sadd.s32 %s37, %s33
      %p202 = scmp.lt.s32.totalorder %s201, 0
      %s203 = scalar_select %p202, %s201, 0
      %s204 = ssub.s32 %s200, %s203
      %p205 = scmp.eq.s32.totalorder %s204, 0
      %s207 = sadd.s32 %s206, 1
      %s208 = scalar_select %p205, %s206, %s207
      %p211 = pneg %p205
      %p212 = scmp.eq.s32.totalorder %s18, 1
      %p213 = por %p211, %p212
      %p214 = scmp.ne.s32.totalorder %s206, %s209
      %p215 = scmp.eq.s32.totalorder %s18, 0
      %p216 = por %p214, %p215
      %p217 = scmp.ne.s32.totalorder %s206, %s209
      %p218 = scmp.eq.s32.totalorder %s23, 1
      %p219 = por %p217, %p218
      %p220 = scmp.ne.s32.totalorder %s209, %s210
      %p221 = scmp.eq.s32.totalorder %s23, 0
      %p222 = por %p220, %p221
      %p223 = scmp.ne.s32.totalorder %s209, %s210
      %p224 = scmp.eq.s32.totalorder %s24, 1
      %p225 = por %p223, %p224
      %p227 = scmp.ne.s32.totalorder %s210, %s226
      %p228 = scmp.eq.s32.totalorder %s24, 0
      %p229 = por %p227, %p228
      %s230 = ssub.s32 %s25, %s37
      %p231 = scmp.eq.s32.totalorder %s230, 0
      %s233 = sadd.s32 %s232, 1
      %s234 = scalar_select %p231, %s232, %s233
      %p237 = pneg %p231
      %p238 = scmp.eq.s32.totalorder %s18, 1
      %p239 = por %p237, %p238
      %p240 = scmp.ne.s32.totalorder %s232, %s235
      %p241 = scmp.eq.s32.totalorder %s18, 0
      %p242 = por %p240, %p241
      %p243 = scmp.ne.s32.totalorder %s232, %s235
      %p244 = scmp.eq.s32.totalorder %s23, 1
      %p245 = por %p243, %p244
      %p246 = scmp.ne.s32.totalorder %s235, %s236
      %p247 = scmp.eq.s32.totalorder %s23, 0
      %p248 = por %p246, %p247
      %p249 = scmp.ne.s32.totalorder %s235, %s236
      %p250 = scmp.eq.s32.totalorder %s24, 1
      %p251 = por %p249, %p250
      %p253 = scmp.ne.s32.totalorder %s236, %s252
      %p254 = scmp.eq.s32.totalorder %s24, 0
      %p255 = por %p253, %p254
      %p256 = scmp.le.s32.totalorder 1, %s18
      %p257 = scmp.lt.s32.totalorder %s18, 3
      %p258 = pnand %p256, %p257
      %p259 = pneg %p258
      // Predicated region
      $region9: #{tpu_custom_call.1} parent=5 // pred_check
        _
      $region10: #{tpu_custom_call.1} parent=5 // pred_check_branch
        %261 = sbr.rel (%p258) target = $region12
      $region11: #{tpu_custom_call.1} parent=5 // pred_region
        %s262 = ssub.s32 %s18, 1
      $region12: #{tpu_custom_call.1} parent=5 // pred_fallthru
        _
      %p263 = scmp.lt.s32.totalorder %s18, 2
      // Predicated region
      $region13: #{tpu_custom_call.1} parent=5 // pred_check
        %p264 = pneg %p263
      $region14: #{tpu_custom_call.1} parent=5 // pred_check_branch
        %266 = sbr.rel (%p264) target = $region16
      $region15: #{tpu_custom_call.1} parent=5 // pred_region
        // Predicated region
        $region17: #{tpu_custom_call.1} parent=15 // pred_check
          %p267 = pneg %p56
        $region18: #{tpu_custom_call.1} parent=15 // pred_check_branch
          %269 = sbr.rel (%p267) target = $region20
        $region19: #{tpu_custom_call.1} parent=15 // pred_region
          %s270 = sand.u32 %s46, 1
          %s271 = scalar_lea.sflag [#allocation3], %s270
          %s272 = sand.u32 %s46, 1
          %s273 = smul.addr %s272, 8
          %s274 = scalar_lea.vmem [#allocation2], %s273
          %s275 = sadd.s32 %s25, %s26
          %p276 = scmp.lt.s32.totalorder %s275, 0
          %s277 = scalar_select %p276, %s275, 0
          %s279 = ssub.s32 128, 128
          %280 = vsyncadd %s271, %s279
          %s281 = smul.addr %s277, 128
          %s282 = scalar_lea.hbm %s0, %s281
          %s284 = sshll.u32 %s274, 4
          %s285 = int_to_ptr.vmem [resolvable:$true] %s284
          %287 = dma.hbm_to_vmem [thread:$0]  %s282, 128, %s285, %s271
        $region20: #{tpu_custom_call.1} parent=15 // pred_fallthru
          _
        // Predicated region
        $region21: #{tpu_custom_call.1} parent=15 // pred_check
          %p288 = pneg %p88
        $region22: #{tpu_custom_call.1} parent=15 // pred_check_branch
          %290 = sbr.rel (%p288) target = $region24
        $region23: #{tpu_custom_call.1} parent=15 // pred_region
          %s291 = sadd.s32 %s25, %s26
          %p292 = scmp.lt.s32.totalorder %s291, 0
          %s293 = scalar_select %p292, %s291, 0
          %p294 = scmp.lt.s32.totalorder %s293, 0
          %s295 = scalar_select %p294, %s293, 0
          %s296 = scalar_lea.vmem %s1, %s295
          %s297 = sadd.s32 %s25, %s26
          %p298 = scmp.lt.s32.totalorder %s297, 0
          %s299 = scalar_select %p298, %s297, 0
        $region24: #{tpu_custom_call.1} parent=15 // pred_fallthru
          _
        // Predicated region
        $region25: #{tpu_custom_call.1} parent=15 // pred_check
          %p300 = pneg %p120
        $region26: #{tpu_custom_call.1} parent=15 // pred_check_branch
          %302 = sbr.rel (%p300) target = $region28
        $region27: #{tpu_custom_call.1} parent=15 // pred_region
          %s303 = sadd.s32 %s25, %s26
          %p304 = scmp.lt.s32.totalorder %s303, 0
          %s305 = scalar_select %p304, %s303, 0
          %p306 = scmp.lt.s32.totalorder %s305, 0
          %s307 = scalar_select %p306, %s305, 0
          %s308 = scalar_lea.vmem %s2, %s307
          %s309 = sadd.s32 %s25, %s26
          %p310 = scmp.lt.s32.totalorder %s309, 0
          %s311 = scalar_select %p310, %s309, 0
        $region28: #{tpu_custom_call.1} parent=15 // pred_fallthru
          _
        // Predicated region
        $region29: #{tpu_custom_call.1} parent=15 // pred_check
          %p312 = pneg %p152
        $region30: #{tpu_custom_call.1} parent=15 // pred_check_branch
          %314 = sbr.rel (%p312) target = $region32
        $region31: #{tpu_custom_call.1} parent=15 // pred_region
          %s315 = sadd.s32 %s25, %s26
          %p316 = scmp.lt.s32.totalorder %s315, 0
          %s317 = scalar_select %p316, %s315, 0
          %p318 = scmp.lt.s32.totalorder %s317, 0
          %s319 = scalar_select %p318, %s317, 0
          %s320 = scalar_lea.vmem %s3, %s319
          %s321 = sadd.s32 %s25, %s26
          %p322 = scmp.lt.s32.totalorder %s321, 0
          %s323 = scalar_select %p322, %s321, 0
        $region32: #{tpu_custom_call.1} parent=15 // pred_fallthru
          _
        // Predicated region
        $region33: #{tpu_custom_call.1} parent=15 // pred_check
          %p324 = pneg %p184
        $region34: #{tpu_custom_call.1} parent=15 // pred_check_branch
          %326 = sbr.rel (%p324) target = $region36
        $region35: #{tpu_custom_call.1} parent=15 // pred_region
          %s327 = sadd.s32 %s25, %s26
          %p328 = scmp.lt.s32.totalorder %s327, 0
          %s329 = scalar_select %p328, %s327, 0
          %p330 = scmp.lt.s32.totalorder %s329, 0
          %s331 = scalar_select %p330, %s329, 0
          %s332 = scalar_lea.vmem %s4, %s331
          %s333 = sadd.s32 %s25, %s26
          %p334 = scmp.lt.s32.totalorder %s333, 0
          %s335 = scalar_select %p334, %s333, 0
        $region36: #{tpu_custom_call.1} parent=15 // pred_fallthru
          _
        // Predicated region
        $region37: #{tpu_custom_call.1} parent=15 // pred_check
          %p336 = pneg %p216
        $region38: #{tpu_custom_call.1} parent=15 // pred_check_branch
          %338 = sbr.rel (%p336) target = $region40
        $region39: #{tpu_custom_call.1} parent=15 // pred_region
          %s339 = sadd.s32 %s25, %s26
          %p340 = scmp.lt.s32.totalorder %s339, 0
          %s341 = scalar_select %p340, %s339, 0
          %p342 = scmp.lt.s32.totalorder %s341, 0
          %s343 = scalar_select %p342, %s341, 0
          %s344 = scalar_lea.vmem %s5, %s343
          %s345 = sadd.s32 %s25, %s26
          %p346 = scmp.lt.s32.totalorder %s345, 0
          %s347 = scalar_select %p346, %s345, 0
        $region40: #{tpu_custom_call.1} parent=15 // pred_fallthru
          _
      $region16: #{tpu_custom_call.1} parent=5 // pred_fallthru
        _
      %p348 = scmp.le.s32.totalorder 1, %s18
      %p349 = scmp.lt.s32.totalorder %s18, 3
      %p350 = pnand %p348, %p349
      %p351 = pneg %p350
      // Predicated region
      $region41: #{tpu_custom_call.1} parent=5 // pred_check
        _
      $region42: #{tpu_custom_call.1} parent=5 // pred_check_branch
        %353 = sbr.rel (%p350) target = $region44
      $region43: #{tpu_custom_call.1} parent=5 // pred_region
        %s354 = ssub.s32 %s18, 1
        %s355 = sand.u32 %s49, 1
        %s356 = scalar_lea.sflag [#allocation3], %s355
        %s357 = sand.u32 %s49, 1
        %s358 = smul.addr %s357, 8
        %s359 = scalar_lea.vmem [#allocation2], %s358
        // Predicated region
        $region45: #{tpu_custom_call.1} parent=43 // pred_check
          %p360 = pneg %p62
        $region46: #{tpu_custom_call.1} parent=43 // pred_check_branch
          %362 = sbr.rel (%p360) target = $region48
        $region47: #{tpu_custom_call.1} parent=43 // pred_region
          %363 = dma.done %s356, 128
        $region48: #{tpu_custom_call.1} parent=43 // pred_fallthru
          _
        %s364 = sand.u32 %s49, 1
        %s365 = scalar_lea.sflag [#allocation3], %s364
        %s366 = sand.u32 %s49, 1
        %s367 = smul.addr %s366, 8
        %s368 = scalar_lea.vmem [#allocation2], %s367
        %p369 = pneg %p62
        %p370 = pneg %p59
        %s371 = sadd.s32 %s27, %s28
        %p372 = scmp.lt.s32.totalorder %s371, 0
        %s373 = scalar_select %p372, %s371, 0
        %p374 = scmp.lt.s32.totalorder %s373, 0
        %s375 = scalar_select %p374, %s373, 0
        %s376 = scalar_lea.vmem %s1, %s375
        %p377 = pneg %p94
        %p378 = pneg %p91
        %s379 = sadd.s32 %s27, %s28
        %p380 = scmp.lt.s32.totalorder %s379, 0
        %s381 = scalar_select %p380, %s379, 0
        %p382 = scmp.lt.s32.totalorder %s381, 0
        %s383 = scalar_select %p382, %s381, 0
        %s384 = scalar_lea.vmem %s2, %s383
        %p385 = pneg %p126
        %p386 = pneg %p123
        %s387 = sadd.s32 %s27, %s28
        %p388 = scmp.lt.s32.totalorder %s387, 0
        %s389 = scalar_select %p388, %s387, 0
        %p390 = scmp.lt.s32.totalorder %s389, 0
        %s391 = scalar_select %p390, %s389, 0
        %s392 = scalar_lea.vmem %s3, %s391
        %p393 = pneg %p158
        %p394 = pneg %p155
        %s395 = sadd.s32 %s27, %s28
        %p396 = scmp.lt.s32.totalorder %s395, 0
        %s397 = scalar_select %p396, %s395, 0
        %p398 = scmp.lt.s32.totalorder %s397, 0
        %s399 = scalar_select %p398, %s397, 0
        %s400 = scalar_lea.vmem %s4, %s399
        %p401 = pneg %p190
        %p402 = pneg %p187
        %s403 = sadd.s32 %s27, %s28
        %p404 = scmp.lt.s32.totalorder %s403, 0
        %s405 = scalar_select %p404, %s403, 0
        %p406 = scmp.lt.s32.totalorder %s405, 0
        %s407 = scalar_select %p406, %s405, 0
        %s408 = scalar_lea.vmem %s5, %s407
        %p409 = pneg %p222
        %p410 = pneg %p219
        %p411 = pneg %p248
        %p412 = pneg %p245
        %s413 = sand.u32 %s235, 1
        %s414 = scalar_lea.sflag [#allocation4], %s413
        %s415 = sand.u32 %s235, 1
        %s416 = smul.addr %s415, 8
        %s417 = scalar_lea.vmem [#allocation5], %s416
        %s418 = sadd.s32 %s27, %s28
        %p419 = scmp.lt.s32.totalorder %s418, 0
        %s420 = scalar_select %p419, %s418, 0
        %s421 = sadd.s32 %s27, %s28
        %p422 = scmp.lt.s32.totalorder %s421, 0
        %s423 = scalar_select %p422, %s421, 0
        %p424 = scmp.lt.s32.totalorder %s423, 0
        %s425 = scalar_select %p424, %s423, 0
        %s426 = scalar_lea.vmem %s1, %s425
        %s427 = sadd.s32 %s27, %s28
        %p428 = scmp.lt.s32.totalorder %s427, 0
        %s429 = scalar_select %p428, %s427, 0
        %s430 = sadd.s32 %s27, %s28
        %p431 = scmp.lt.s32.totalorder %s430, 0
        %s432 = scalar_select %p431, %s430, 0
        %p433 = scmp.lt.s32.totalorder %s432, 0
        %s434 = scalar_select %p433, %s432, 0
        %s435 = scalar_lea.vmem %s2, %s434
        %s436 = sadd.s32 %s27, %s28
        %p437 = scmp.lt.s32.totalorder %s436, 0
        %s438 = scalar_select %p437, %s436, 0
        %s439 = sadd.s32 %s27, %s28
        %p440 = scmp.lt.s32.totalorder %s439, 0
        %s441 = scalar_select %p440, %s439, 0
        %p442 = scmp.lt.s32.totalorder %s441, 0
        %s443 = scalar_select %p442, %s441, 0
        %s444 = scalar_lea.vmem %s3, %s443
        %s445 = sadd.s32 %s27, %s28
        %p446 = scmp.lt.s32.totalorder %s445, 0
        %s447 = scalar_select %p446, %s445, 0
        %s448 = sadd.s32 %s27, %s28
        %p449 = scmp.lt.s32.totalorder %s448, 0
        %s450 = scalar_select %p449, %s448, 0
        %p451 = scmp.lt.s32.totalorder %s450, 0
        %s452 = scalar_select %p451, %s450, 0
        %s453 = scalar_lea.vmem %s4, %s452
        %s454 = sadd.s32 %s27, %s28
        %p455 = scmp.lt.s32.totalorder %s454, 0
        %s456 = scalar_select %p455, %s454, 0
        %s457 = sadd.s32 %s27, %s28
        %p458 = scmp.lt.s32.totalorder %s457, 0
        %s459 = scalar_select %p458, %s457, 0
        %p460 = scmp.lt.s32.totalorder %s459, 0
        %s461 = scalar_select %p460, %s459, 0
        %s462 = scalar_lea.vmem %s5, %s461
        %s463 = sadd.s32 %s27, %s28
        %p464 = scmp.lt.s32.totalorder %s463, 0
        %s465 = scalar_select %p464, %s463, 0
        %p466 = scmp.eq.s32.totalorder %s28, 0
        // Predicated region
        $region49: #{tpu_custom_call.1} parent=43 // pred_check
          %p467 = pneg %p466
        $region50: #{tpu_custom_call.1} parent=43 // pred_check_branch
          %469 = sbr.rel (%p467) target = $region52
        $region51: #{tpu_custom_call.1} parent=43 // pred_region
          %470 = vst [vmem:[%s417] sm:$0xff] 0.0
        $region52: #{tpu_custom_call.1} parent=43 // pred_fallthru
          _
        %s471 = sadd.s32 %s27, %s28
        %s472 = smul.u32 %s471, 128
        %v473 = vld [vmem:[%s359] sm:$0x1f]
        %v474 = vld [vmem:[%s426] sm:$0x1]
        %v475 = vld [vmem:[%s435] sm:$0x1]
        %v476 = vld [vmem:[%s444] sm:$0x1]
        %v477 = vld [vmem:[%s453] sm:$0x1]
        %v478 = vld [vmem:[%s462] sm:$0x1]
        %s479 = sadd.s32 %s472, 128
        %p480 = scmp.le.s32.totalorder %s479, 8
        // Predicated region
        $region53: #{tpu_custom_call.1} parent=43 // pred_check
          %p481 = pneg %p480
        $region54: #{tpu_custom_call.1} parent=43 // pred_check_branch
          %483 = sbr.rel (%p481) target = $region56
        $region55: #{tpu_custom_call.1} parent=43 // pred_region
          %v484 = vmax.f32 %v473, 0.0
          %v485 = vmul.f32 %v473, %v474
          %v486 = vsub.f32 %v484, %v485
          %v487 = vand.u32 2147483647, %v473
          %v488 = vsub.f32 0.0, %v487
          %v489 = vmul.f32 %v488, 1.442695
          %v490 = vpow.pop %v489
          %v491 = vadd.f32 %v490, 1.0
          %v492 = vlog2.pop %v491
          %v493 = vmul.f32 %v492, 0.6931472
          %v494 = vadd.f32 %v486, %v493
          %vm495 = vcmask 1040384
          %v496 = vsel %vm495, %v494, 0.0
          %497 = vadd.xlane.f32.xlu0 %v496
          %v498 = vpop.xlane.xlu0 %497
          %v500 = vlaneseq
          %v501 = vshrl.u32 %v500, 7
          %v502 = vsub.s32 0, %v501
          %v503 = vrot.slane %v475, %v502
          %v505 = vsub.f32 %v473, %v503
          %v506 = vmul.f32 %v505, %v505
          %vm507 = vcmask 1041409
          %v508 = vsel %vm507, %v506, 0.0
          %509 = vadd.xlane.f32.xlu0 %v508
          %v510 = vpop.xlane.xlu0 %509
          %v512 = vlaneseq
          %v513 = vshrl.u32 %v512, 7
          %v514 = vsub.s32 0, %v513
          %v515 = vrot.slane %v476, %v514
          %v517 = vsub.f32 %v473, %v515
          %v518 = vmul.f32 %v517, %v517
          %vm519 = vcmask 1042434
          %v520 = vsel %vm519, %v518, 0.0
          %521 = vadd.xlane.f32.xlu0 %v520
          %v522 = vpop.xlane.xlu0 %521
          %v524 = vlaneseq
          %v525 = vshrl.u32 %v524, 7
          %v526 = vsub.s32 0, %v525
          %v527 = vrot.slane %v477, %v526
          %v529 = vsub.f32 %v473, %v527
          %v530 = vmul.f32 %v529, %v529
          %vm531 = vcmask 1043459
          %v532 = vsel %vm531, %v530, 0.0
          %533 = vadd.xlane.f32.xlu0 %v532
          %v534 = vpop.xlane.xlu0 %533
          %v536 = vlaneseq
          %v537 = vshrl.u32 %v536, 7
          %v538 = vsub.s32 0, %v537
          %v539 = vrot.slane %v478, %v538
          %v541 = vsub.f32 %v473, %v539
          %v542 = vmul.f32 %v541, %v541
          %vm543 = vcmask 1044484
          %v544 = vsel %vm543, %v542, 0.0
          %545 = vadd.xlane.f32.xlu0 %v544
          %v546 = vpop.xlane.xlu0 %545
          %v547 = vlaneseq
          %v548 = vshrl.u32 %v547, 7
          %vm549 = vcmp.eq.s32.totalorder %v548, 0
          %v550 = vlaneseq
          %v551 = vshrl.u32 %v550, 7
          %v552 = vsub.s32 0, %v551
          %v553 = vrot.slane %v498, %v552
          %v554 = vsel %vm549, %v553, 0.0
          %v555 = vadd.f32 %v554, 0.0
          %vm556 = vcmp.eq.s32.totalorder %v548, 1
          %v557 = vlaneseq
          %v558 = vshrl.u32 %v557, 7
          %v559 = vsub.s32 1, %v558
          %v560 = vrot.slane %v510, %v559
          %v561 = vsel %vm556, %v560, 0.0
          %v562 = vadd.f32 %v555, %v561
          %vm563 = vcmp.eq.s32.totalorder %v548, 2
          %v564 = vlaneseq
          %v565 = vshrl.u32 %v564, 7
          %v566 = vsub.s32 2, %v565
          %v567 = vrot.slane %v522, %v566
          %v568 = vsel %vm563, %v567, 0.0
          %v569 = vadd.f32 %v562, %v568
          %vm570 = vcmp.eq.s32.totalorder %v548, 3
          %v571 = vlaneseq
          %v572 = vshrl.u32 %v571, 7
          %v573 = vsub.s32 3, %v572
          %v574 = vrot.slane %v534, %v573
          %v575 = vsel %vm570, %v574, 0.0
          %v576 = vadd.f32 %v569, %v575
          %vm577 = vcmp.eq.s32.totalorder %v548, 4
          %v578 = vlaneseq
          %v579 = vshrl.u32 %v578, 7
          %v580 = vsub.s32 4, %v579
          %v581 = vrot.slane %v546, %v580
          %v582 = vsel %vm577, %v581, 0.0
          %v583 = vadd.f32 %v576, %v582
          %v584 = vld [vmem:[%s417] sm:$0x1f]
          %v585 = vadd.f32 %v584, %v583
          %vm586 = vcmask 4096
          %587 = vst.msk [vmem:[%s417] sm:$0x1f] %vm586, %v585
        $region56: #{tpu_custom_call.1} parent=43 // pred_fallthru
          _
        %p588 = scmp.gt.s32.totalorder %s479, 8
        // Predicated region
        $region57: #{tpu_custom_call.1} parent=43 // pred_check
          %p589 = pneg %p588
        $region58: #{tpu_custom_call.1} parent=43 // pred_check_branch
          %591 = sbr.rel (%p589) target = $region60
        $region59: #{tpu_custom_call.1} parent=43 // pred_region
          %v592 = vlaneseq
          %v593 = vand.u32 %v592, 127
          %v594 = vstv %s472
          %v595 = vadd.s32 %v593, %v594
          %vm596 = vcmp.lt.s32.totalorder %v595, 8
          %v597 = vmax.f32 %v473, 0.0
          %v598 = vmul.f32 %v473, %v474
          %v599 = vsub.f32 %v597, %v598
          %v600 = vand.u32 2147483647, %v473
          %v601 = vsub.f32 0.0, %v600
          %v602 = vmul.f32 %v601, 1.442695
          %v603 = vpow.pop %v602
          %v604 = vadd.f32 %v603, 1.0
          %v605 = vlog2.pop %v604
          %v606 = vmul.f32 %v605, 0.6931472
          %v607 = vadd.f32 %v599, %v606
          %v608 = vsel %vm596, %v607, 0.0
          %vm609 = vcmask 1040384
          %v610 = vsel %vm609, %v608, 0.0
          %611 = vadd.xlane.f32.xlu0 %v610
          %v612 = vpop.xlane.xlu0 %611
          %v614 = vlaneseq
          %v615 = vshrl.u32 %v614, 7
          %v616 = vsub.s32 0, %v615
          %v617 = vrot.slane %v475, %v616
          %v619 = vsub.f32 %v473, %v617
          %v620 = vsel %vm596, %v619, 0.0
          %v621 = vmul.f32 %v620, %v620
          %vm622 = vcmask 1041409
          %v623 = vsel %vm622, %v621, 0.0
          %624 = vadd.xlane.f32.xlu0 %v623
          %v625 = vpop.xlane.xlu0 %624
          %v627 = vlaneseq
          %v628 = vshrl.u32 %v627, 7
          %v629 = vsub.s32 0, %v628
          %v630 = vrot.slane %v476, %v629
          %v632 = vsub.f32 %v473, %v630
          %v633 = vsel %vm596, %v632, 0.0
          %v634 = vmul.f32 %v633, %v633
          %vm635 = vcmask 1042434
          %v636 = vsel %vm635, %v634, 0.0
          %637 = vadd.xlane.f32.xlu0 %v636
          %v638 = vpop.xlane.xlu0 %637
          %v640 = vlaneseq
          %v641 = vshrl.u32 %v640, 7
          %v642 = vsub.s32 0, %v641
          %v643 = vrot.slane %v477, %v642
          %v645 = vsub.f32 %v473, %v643
          %v646 = vsel %vm596, %v645, 0.0
          %v647 = vmul.f32 %v646, %v646
          %vm648 = vcmask 1043459
          %v649 = vsel %vm648, %v647, 0.0
          %650 = vadd.xlane.f32.xlu0 %v649
          %v651 = vpop.xlane.xlu0 %650
          %v653 = vlaneseq
          %v654 = vshrl.u32 %v653, 7
          %v655 = vsub.s32 0, %v654
          %v656 = vrot.slane %v478, %v655
          %v658 = vsub.f32 %v473, %v656
          %v659 = vsel %vm596, %v658, 0.0
          %v660 = vmul.f32 %v659, %v659
          %vm661 = vcmask 1044484
          %v662 = vsel %vm661, %v660, 0.0
          %663 = vadd.xlane.f32.xlu0 %v662
          %v664 = vpop.xlane.xlu0 %663
          %v665 = vlaneseq
          %v666 = vshrl.u32 %v665, 7
          %vm667 = vcmp.eq.s32.totalorder %v666, 0
          %v668 = vlaneseq
          %v669 = vshrl.u32 %v668, 7
          %v670 = vsub.s32 0, %v669
          %v671 = vrot.slane %v612, %v670
          %v672 = vsel %vm667, %v671, 0.0
          %v673 = vadd.f32 %v672, 0.0
          %vm674 = vcmp.eq.s32.totalorder %v666, 1
          %v675 = vlaneseq
          %v676 = vshrl.u32 %v675, 7
          %v677 = vsub.s32 1, %v676
          %v678 = vrot.slane %v625, %v677
          %v679 = vsel %vm674, %v678, 0.0
          %v680 = vadd.f32 %v673, %v679
          %vm681 = vcmp.eq.s32.totalorder %v666, 2
          %v682 = vlaneseq
          %v683 = vshrl.u32 %v682, 7
          %v684 = vsub.s32 2, %v683
          %v685 = vrot.slane %v638, %v684
          %v686 = vsel %vm681, %v685, 0.0
          %v687 = vadd.f32 %v680, %v686
          %vm688 = vcmp.eq.s32.totalorder %v666, 3
          %v689 = vlaneseq
          %v690 = vshrl.u32 %v689, 7
          %v691 = vsub.s32 3, %v690
          %v692 = vrot.slane %v651, %v691
          %v693 = vsel %vm688, %v692, 0.0
          %v694 = vadd.f32 %v687, %v693
          %vm695 = vcmp.eq.s32.totalorder %v666, 4
          %v696 = vlaneseq
          %v697 = vshrl.u32 %v696, 7
          %v698 = vsub.s32 4, %v697
          %v699 = vrot.slane %v664, %v698
          %v700 = vsel %vm695, %v699, 0.0
          %v701 = vadd.f32 %v694, %v700
          %v702 = vld [vmem:[%s417] sm:$0x1f]
          %v703 = vadd.f32 %v702, %v701
          %vm704 = vcmask 4096
          %705 = vst.msk [vmem:[%s417] sm:$0x1f] %vm704, %v703
        $region60: #{tpu_custom_call.1} parent=43 // pred_fallthru
          _
        %s706 = sand.u32 %s235, 1
        %s707 = scalar_lea.sflag [#allocation4], %s706
        %s708 = sand.u32 %s235, 1
        %s709 = smul.addr %s708, 8
        %s710 = scalar_lea.vmem [#allocation5], %s709
        // Predicated region
        $region61: #{tpu_custom_call.1} parent=43 // pred_check
          %p711 = pneg %p245
        $region62: #{tpu_custom_call.1} parent=43 // pred_check_branch
          %713 = sbr.rel (%p711) target = $region64
        $region63: #{tpu_custom_call.1} parent=43 // pred_region
          %s715 = ssub.s32 128, 128
          %716 = vsyncadd %s707, %s715
          %s717 = smul.addr %s27, 128
          %s718 = scalar_lea.hbm %s6, %s717
          %s720 = sshll.u32 %s710, 4
          %s721 = int_to_ptr.vmem [resolvable:$true] %s720
          %723 = dma.vmem_to_hbm [thread:$0]  %s721, 128, %s718, %s707
        $region64: #{tpu_custom_call.1} parent=43 // pred_fallthru
          _
      $region44: #{tpu_custom_call.1} parent=5 // pred_fallthru
        _
      %p724 = scmp.le.s32.totalorder 2, %s18
      // Predicated region
      $region65: #{tpu_custom_call.1} parent=5 // pred_check
        %p725 = pneg %p724
      $region66: #{tpu_custom_call.1} parent=5 // pred_check_branch
        %727 = sbr.rel (%p725) target = $region68
      $region67: #{tpu_custom_call.1} parent=5 // pred_region
        %s728 = ssub.s32 %s18, 2
        // Predicated region
        $region69: #{tpu_custom_call.1} parent=67 // pred_check
          %p729 = pneg %p251
        $region70: #{tpu_custom_call.1} parent=67 // pred_check_branch
          %731 = sbr.rel (%p729) target = $region72
        $region71: #{tpu_custom_call.1} parent=67 // pred_region
          %s732 = sand.u32 %s236, 1
          %s733 = scalar_lea.sflag [#allocation4], %s732
          %s734 = sand.u32 %s236, 1
          %s735 = smul.addr %s734, 8
          %s736 = scalar_lea.vmem [#allocation5], %s735
          %737 = dma.done %s733, 128
        $region72: #{tpu_custom_call.1} parent=67 // pred_fallthru
          _
      $region68: #{tpu_custom_call.1} parent=5 // pred_fallthru
        _
    $region6: #{tpu_custom_call.1} parent=1 // loop_footer
      %s22 = sadd.s32 1, %s18
    $region7: #{tpu_custom_call.1} parent=1 // loop_footer_branch
      %17 = sbr.rel target = $region3
    $region8: #{tpu_custom_call.1} parent=1 // loop_exit
      _
    %738 = vsyncpa [#allocation3], 1
    %s739 = scalar_lea.sflag [#allocation3], 1
    %740 = vsyncpa %s739, 1
    %741 = vsyncpa [#allocation4], 1
    %s742 = scalar_lea.sflag [#allocation4], 1
    %743 = vsyncpa %s742, 1

</llo_original>
